<compile_context>
chip_gen: v6e
topology: v6e:2x2x1
jax: 0.10.0
libtpu: 0.0.40
codegen_flags: <defaults>
</compile_context>

<pallas_src>
import math

import jax
import jax.numpy as jnp
from jax.experimental import pallas as pl
from jax.experimental.pallas import tpu as pltpu

# Combined (input block + output block) byte budget per grid step.  With
# default double-buffering the resident footprint is 2x this (~32 MiB), which
# fits every generation once vmem_limit_bytes is raised explicitly.
_TARGET_PAIR_BYTES = 16 * 1024 * 1024
_VMEM_LIMIT_CAP = 48 * 1024 * 1024      # stay well inside v7x's 64 MiB physical VMEM
_VMEM_LIMIT_FLOOR = 16 * 1024 * 1024    # never request less than the smallest default
_LANE_CANDIDATES = (8192, 4096, 2048, 1024, 512, 256, 128)


def _sublane_granule(itemsize: int) -> int:
    """Native second-minor tile multiple for a dtype width (packed sublanes)."""
    return {4: 8, 2: 16, 1: 32}.get(itemsize, 8)


def _choose_2d_view(total: int, granule: int):
    """Pick a lane-dense (rows, lane) view.  Prefer the largest lane width that
    still leaves enough rows for >=2 row-tiles; otherwise the largest divisor.
    Returns None if no 128-multiple lane divides the element count."""
    fallback = None
    for lane in _LANE_CANDIDATES:
        if total % lane == 0:
            rows = total // lane
            if fallback is None:
                fallback = (rows, lane)
            if rows >= 2 * granule:
                return rows, lane
    return fallback


def _choose_block_rows(rows: int, lane: int, in_itemsize: int, out_itemsize: int,
                       granule: int) -> int:
    """Row-tile size: granule-aligned, near the combined byte budget, and small
    enough to yield >=2 blocks whenever the row extent allows it."""
    pair_row_bytes = lane * (in_itemsize + out_itemsize)
    budget_rows = max(granule, (_TARGET_PAIR_BYTES // pair_row_bytes) // granule * granule)
    block_rows = min(rows, budget_rows)
    if rows >= 2 * granule:
        # Guarantee at least two blocks (v7x two-TensorCore sharding + pipelining).
        half = -(-rows // 2)
        half = -(-half // granule) * granule
        block_rows = min(block_rows, half)
    if block_rows < rows:
        block_rows = max(granule, (block_rows // granule) * granule)
    else:
        block_rows = rows  # full extent: always a legal block shape
    return block_rows


def _xla_scale(x: jax.Array, scale: float, out_dtype) -> jax.Array:
    """Plain XLA fallback with the same promotion semantics."""
    return (x.astype(out_dtype) * jnp.asarray(scale, dtype=out_dtype)).astype(out_dtype)


def scale_forward(x: jax.Array, scale: float) -> jax.Array:
    """Pallas equivalent of Scale(scale).forward(x) == x * scale."""
    scale = float(scale)

    # PyTorch promotes int/bool * python-float to the default float dtype.
    if jnp.issubdtype(x.dtype, jnp.floating):
        out_dtype = x.dtype
    else:
        out_dtype = jnp.float32

    in_itemsize = jnp.dtype(x.dtype).itemsize
    out_itemsize = jnp.dtype(out_dtype).itemsize
    total = math.prod(x.shape)

    # Robustness fallbacks: empty arrays, >32-bit dtypes (precision), and
    # element counts the lane-dense tiler can't factor cleanly.
    if total == 0 or in_itemsize > 4 or out_itemsize > 4:
        return _xla_scale(x, scale, out_dtype)

    granule = max(_sublane_granule(in_itemsize), _sublane_granule(out_itemsize))
    view = _choose_2d_view(total, granule)
    if view is None:
        return _xla_scale(x, scale, out_dtype)
    rows, lane = view

    block_rows = _choose_block_rows(rows, lane, in_itemsize, out_itemsize, granule)
    n_blocks = pl.cdiv(rows, block_rows)

    # Resident VMEM = double-buffered (input block + output block) + headroom.
    resident = 2 * block_rows * lane * (in_itemsize + out_itemsize)
    vmem_limit = int(min(max(resident + (4 << 20), _VMEM_LIMIT_FLOOR), _VMEM_LIMIT_CAP))

    def _scale_kernel(x_ref, o_ref):
        # Multiply in the output dtype (bf16 stays bf16 on v6e/v7x; int/bool
        # inputs were promoted to f32 via out_dtype).
        o_ref[...] = x_ref[...].astype(o_ref.dtype) * jnp.asarray(scale, dtype=o_ref.dtype)

    x2 = x.reshape(rows, lane)
    out2 = pl.pallas_call(
        _scale_kernel,
        out_shape=jax.ShapeDtypeStruct((rows, lane), out_dtype),
        grid_spec=pl.GridSpec(
            grid=(n_blocks,),
            in_specs=[pl.BlockSpec((block_rows, lane), lambda i: (i, 0))],
            out_specs=pl.BlockSpec((block_rows, lane), lambda i: (i, 0)),
        ),
        compiler_params=pltpu.CompilerParams(
            dimension_semantics=("parallel",),
            vmem_limit_bytes=vmem_limit,
        ),
        cost_estimate=pl.CostEstimate(
            flops=total,
            transcendentals=0,
            bytes_accessed=total * in_itemsize + total * out_itemsize,
        ),
    )(x2)
    return out2.reshape(x.shape)


if __name__ == "__main__":
    key = jax.random.PRNGKey(0)
    scale = 1.0 / 255.0  # Scale(1/255) as used for pixel normalization in ppo.py

    # Float path (NCHW frame stack, small shape).
    x = jax.random.normal(key, (2, 4, 16, 16), dtype=jnp.float32)
    out = jax.block_until_ready(scale_forward(x, scale))
    ref = x * jnp.float32(scale)
    assert out.shape == x.shape and out.dtype == jnp.float32
    assert jnp.allclose(out, ref, atol=1e-6, rtol=1e-6)

    # Integer-pixel path (uint8 frames -> promoted to f32, like torch * float).
    xu8 = jax.random.randint(key, (2, 4, 16, 16), 0, 256, dtype=jnp.int32).astype(jnp.uint8)
    out_u8 = jax.block_until_ready(scale_forward(xu8, scale))
    ref_u8 = xu8.astype(jnp.float32) * jnp.float32(scale)
    assert out_u8.shape == xu8.shape and out_u8.dtype == jnp.float32
    assert jnp.allclose(out_u8, ref_u8, atol=1e-6, rtol=1e-6)

    print("KERNEL_OK")
</pallas_src>

<mosaic_0001>
module attributes {stable_mosaic.version = 11 : i64} {
  func.func @_scale_kernel(%arg0: i32, %arg1: memref<8x128xf32, #tpu.memory_space<vmem>>, %arg2: memref<8x128xf32, #tpu.memory_space<vmem>>) attributes {dimension_semantics = [#tpu.dimension_semantics<parallel>], iteration_bounds = array<i64: 2>, scalar_prefetch = 0 : i64, scratch_operands = 0 : i64, tpu.core_type = #tpu.core_type<tc>, window_params = [{transform_indices = @transform_0, window_bounds = array<i64: 8, 128>}, {transform_indices = @transform_1, window_bounds = array<i64: 8, 128>}]} {
    %c0 = arith.constant 0 : index
    %c0_0 = arith.constant 0 : index
    %0 = vector.load %arg1[%c0, %c0_0] : memref<8x128xf32, #tpu.memory_space<vmem>>, vector<8x128xf32>
    %cst = arith.constant 0.00392156886 : f32
    %1 = vector.broadcast %cst : f32 to vector<8x128xf32>
    %2 = arith.mulf %0, %1 : vector<8x128xf32>
    %c0_1 = arith.constant 0 : index
    %c0_2 = arith.constant 0 : index
    %3 = vector.load %arg2[%c0_1, %c0_2] : memref<8x128xf32, #tpu.memory_space<vmem>>, vector<8x128xf32>
    tpu.vector_store %arg2[%c0_1, %c0_2], %2 {strides = array<i32>} : memref<8x128xf32, #tpu.memory_space<vmem>>, vector<8x128xf32>,
    return
  }
  func.func @transform_0(%arg0: i32) -> (i32, i32) {
    %c0_i32 = arith.constant 0 : i32
    %c0_i32_0 = arith.constant 0 : i32
    return %arg0, %c0_i32 : i32, i32
  }
  func.func @transform_1(%arg0: i32) -> (i32, i32) {
    %c0_i32 = arith.constant 0 : i32
    %c0_i32_0 = arith.constant 0 : i32
    return %arg0, %c0_i32 : i32, i32
  }
}

</mosaic_0001>

<llo_original>
// kernel: tpu_custom_call.1
$region0: #{tpu_custom_call.1}
  #allocation0 [shape = 'u32[]', space=smem, size = 0x4, offset = 0x4, fixed_abs, tag = 'smem constant byte address 0x4 - core index']
  #allocation1 [shape = 'u32[144,128]{1,0:T(1,128)}', space=vmem, size = 0x12000, scoped, tag = 'internal scratch']
  %s0 = inlined_call_operand.hbm [shape: f32[16,128], index: 0, kind: input, shape index: {}]
  %s1 = inlined_call_operand.hbm [shape: f32[16,128], index: 1, kind: output, shape index: {}]
  %s2 = sld [smem:[#allocation0]]
  $region41: #{tpu_custom_call.1} parent=0
    _
  %s4 = ssub.s32 1, %s2
  %s5 = scalar_select 0, %s4, %s2
  $region1: #{tpu_custom_call.1} parent=0
    #allocation2 [shape = 'u8[8192]{0}', space=vmem, size = 0x2000, scoped, tag = 'input window, operand 0']
    #allocation3 [shape = 's32[2]{0}', space=sflag, size = 0x8, scoped, tag = 'scoped memory for tpu_custom_call.1']
    #allocation4 [shape = 's32[2]{0}', space=sflag, size = 0x8, scoped, tag = 'scoped memory for tpu_custom_call.1']
    #allocation5 [shape = 'u8[8192]{0}', space=vmem, size = 0x2000, scoped, tag = 'output window, operand 0']
    %6 = vsyncpa [#allocation3], 0
    %s7 = scalar_lea.sflag [#allocation3], 1
    %8 = vsyncpa %s7, 0
    %9 = vsyncpa [#allocation4], 0
    %s10 = scalar_lea.sflag [#allocation4], 1
    %11 = vsyncpa %s10, 0
    loop: start=0, step=1, limit=4
    $region2: #{tpu_custom_call.1} parent=1 // loop_pre_header
      _
    $region3: #{tpu_custom_call.1} parent=1 // loop_header
      %s13 = sphi 0, %s17
      %p14 = scmp.ge.s32.totalorder %s13, 4
      %s23 = sphi 0, %s25
      %s26 = sphi 0, %s23
      %s27 = sphi 0, %s26
      %s43 = sphi 0, %s27
      %s49 = sphi 0, %s51
      %s52 = sphi 0, %s49
      %s53 = sphi 0, %s52
      %s69 = sphi 0, %s53
    $region4: #{tpu_custom_call.1} parent=1 // loop_header_branch
      %16 = sbr.rel (%p14) target = $region8
    $region5: #{tpu_custom_call.1} parent=1 // loop_body
      %s18 = ssub.s32 %s13, 1
      %s19 = ssub.s32 %s13, 2
      %s20 = sadd.s32 %s13, 1
      %s21 = ssub.s32 %s13, %s20
      %p22 = scmp.eq.s32.totalorder %s21, 0
      %s24 = sadd.s32 %s23, 1
      %s25 = scalar_select %p22, %s23, %s24
      %p28 = pneg %p22
      %p29 = scmp.eq.s32.totalorder %s13, 1
      %p30 = por %p28, %p29
      %p31 = scmp.ne.s32.totalorder %s23, %s26
      %p32 = scmp.eq.s32.totalorder %s13, 0
      %p33 = por %p31, %p32
      %p34 = scmp.ne.s32.totalorder %s23, %s26
      %p35 = scmp.eq.s32.totalorder %s18, 1
      %p36 = por %p34, %p35
      %p37 = scmp.ne.s32.totalorder %s26, %s27
      %p38 = scmp.eq.s32.totalorder %s18, 0
      %p39 = por %p37, %p38
      %p40 = scmp.ne.s32.totalorder %s26, %s27
      %p41 = scmp.eq.s32.totalorder %s19, 1
      %p42 = por %p40, %p41
      %p44 = scmp.ne.s32.totalorder %s27, %s43
      %p45 = scmp.eq.s32.totalorder %s19, 0
      %p46 = por %p44, %p45
      %s47 = ssub.s32 %s13, %s20
      %p48 = scmp.eq.s32.totalorder %s47, 0
      %s50 = sadd.s32 %s49, 1
      %s51 = scalar_select %p48, %s49, %s50
      %p54 = pneg %p48
      %p55 = scmp.eq.s32.totalorder %s13, 1
      %p56 = por %p54, %p55
      %p57 = scmp.ne.s32.totalorder %s49, %s52
      %p58 = scmp.eq.s32.totalorder %s13, 0
      %p59 = por %p57, %p58
      %p60 = scmp.ne.s32.totalorder %s49, %s52
      %p61 = scmp.eq.s32.totalorder %s18, 1
      %p62 = por %p60, %p61
      %p63 = scmp.ne.s32.totalorder %s52, %s53
      %p64 = scmp.eq.s32.totalorder %s18, 0
      %p65 = por %p63, %p64
      %p66 = scmp.ne.s32.totalorder %s52, %s53
      %p67 = scmp.eq.s32.totalorder %s19, 1
      %p68 = por %p66, %p67
      %p70 = scmp.ne.s32.totalorder %s53, %s69
      %p71 = scmp.eq.s32.totalorder %s19, 0
      %p72 = por %p70, %p71
      %p73 = scmp.le.s32.totalorder 1, %s13
      %p74 = scmp.lt.s32.totalorder %s13, 3
      %p75 = pnand %p73, %p74
      %p76 = pneg %p75
      // Predicated region
      $region9: #{tpu_custom_call.1} parent=5 // pred_check
        _
      $region10: #{tpu_custom_call.1} parent=5 // pred_check_branch
        %78 = sbr.rel (%p75) target = $region12
      $region11: #{tpu_custom_call.1} parent=5 // pred_region
        %s79 = ssub.s32 %s13, 1
      $region12: #{tpu_custom_call.1} parent=5 // pred_fallthru
        _
      %p80 = scmp.lt.s32.totalorder %s13, 2
      // Predicated region
      $region13: #{tpu_custom_call.1} parent=5 // pred_check
        %p81 = pneg %p80
      $region14: #{tpu_custom_call.1} parent=5 // pred_check_branch
        %83 = sbr.rel (%p81) target = $region16
      $region15: #{tpu_custom_call.1} parent=5 // pred_region
        // Predicated region
        $region17: #{tpu_custom_call.1} parent=15 // pred_check
          %p84 = pneg %p33
        $region18: #{tpu_custom_call.1} parent=15 // pred_check_branch
          %86 = sbr.rel (%p84) target = $region20
        $region19: #{tpu_custom_call.1} parent=15 // pred_region
          %s87 = sand.u32 %s23, 1
          %s88 = scalar_lea.sflag [#allocation3], %s87
          %s89 = sand.u32 %s23, 1
          %s90 = smul.addr %s89, 8
          %s91 = scalar_lea.vmem [#allocation2], %s90
          %s93 = ssub.s32 128, 128
          %94 = vsyncadd %s88, %s93
          %s95 = smul.addr %s13, 128
          %s96 = scalar_lea.hbm %s0, %s95
          %s98 = sshll.u32 %s91, 4
          %s99 = int_to_ptr.vmem [resolvable:$true] %s98
          %101 = dma.hbm_to_vmem [thread:$0]  %s96, 128, %s99, %s88
        $region20: #{tpu_custom_call.1} parent=15 // pred_fallthru
          _
      $region16: #{tpu_custom_call.1} parent=5 // pred_fallthru
        _
      %p102 = scmp.le.s32.totalorder 1, %s13
      %p103 = scmp.lt.s32.totalorder %s13, 3
      %p104 = pnand %p102, %p103
      %p105 = pneg %p104
      // Predicated region
      $region21: #{tpu_custom_call.1} parent=5 // pred_check
        _
      $region22: #{tpu_custom_call.1} parent=5 // pred_check_branch
        %107 = sbr.rel (%p104) target = $region24
      $region23: #{tpu_custom_call.1} parent=5 // pred_region
        %s108 = ssub.s32 %s13, 1
        %s109 = sand.u32 %s26, 1
        %s110 = scalar_lea.sflag [#allocation3], %s109
        %s111 = sand.u32 %s26, 1
        %s112 = smul.addr %s111, 8
        %s113 = scalar_lea.vmem [#allocation2], %s112
        // Predicated region
        $region25: #{tpu_custom_call.1} parent=23 // pred_check
          %p114 = pneg %p39
        $region26: #{tpu_custom_call.1} parent=23 // pred_check_branch
          %116 = sbr.rel (%p114) target = $region28
        $region27: #{tpu_custom_call.1} parent=23 // pred_region
          %117 = dma.done %s110, 128
        $region28: #{tpu_custom_call.1} parent=23 // pred_fallthru
          _
        %s118 = sand.u32 %s26, 1
        %s119 = scalar_lea.sflag [#allocation3], %s118
        %s120 = sand.u32 %s26, 1
        %s121 = smul.addr %s120, 8
        %s122 = scalar_lea.vmem [#allocation2], %s121
        %p123 = pneg %p39
        %p124 = pneg %p36
        %p125 = pneg %p65
        %p126 = pneg %p62
        %s127 = sand.u32 %s52, 1
        %s128 = scalar_lea.sflag [#allocation4], %s127
        %s129 = sand.u32 %s52, 1
        %s130 = smul.addr %s129, 8
        %s131 = scalar_lea.vmem [#allocation5], %s130
        %v132 = vld [vmem:[%s113] sm:$0xff]
        %v133 = vmul.f32 %v132, 0.003921569
        %134 = vst [vmem:[%s131] sm:$0xff] %v133
        %s135 = sand.u32 %s52, 1
        %s136 = scalar_lea.sflag [#allocation4], %s135
        %s137 = sand.u32 %s52, 1
        %s138 = smul.addr %s137, 8
        %s139 = scalar_lea.vmem [#allocation5], %s138
        // Predicated region
        $region29: #{tpu_custom_call.1} parent=23 // pred_check
          %p140 = pneg %p62
        $region30: #{tpu_custom_call.1} parent=23 // pred_check_branch
          %142 = sbr.rel (%p140) target = $region32
        $region31: #{tpu_custom_call.1} parent=23 // pred_region
          %s144 = ssub.s32 128, 128
          %145 = vsyncadd %s136, %s144
          %s146 = smul.addr %s18, 128
          %s147 = scalar_lea.hbm %s1, %s146
          %s149 = sshll.u32 %s139, 4
          %s150 = int_to_ptr.vmem [resolvable:$true] %s149
          %152 = dma.vmem_to_hbm [thread:$0]  %s150, 128, %s147, %s136
        $region32: #{tpu_custom_call.1} parent=23 // pred_fallthru
          _
      $region24: #{tpu_custom_call.1} parent=5 // pred_fallthru
        _
      %p153 = scmp.le.s32.totalorder 2, %s13
      // Predicated region
      $region33: #{tpu_custom_call.1} parent=5 // pred_check
        %p154 = pneg %p153
      $region34: #{tpu_custom_call.1} parent=5 // pred_check_branch
        %156 = sbr.rel (%p154) target = $region36
      $region35: #{tpu_custom_call.1} parent=5 // pred_region
        %s157 = ssub.s32 %s13, 2
        // Predicated region
        $region37: #{tpu_custom_call.1} parent=35 // pred_check
          %p158 = pneg %p68
        $region38: #{tpu_custom_call.1} parent=35 // pred_check_branch
          %160 = sbr.rel (%p158) target = $region40
        $region39: #{tpu_custom_call.1} parent=35 // pred_region
          %s161 = sand.u32 %s53, 1
          %s162 = scalar_lea.sflag [#allocation4], %s161
          %s163 = sand.u32 %s53, 1
          %s164 = smul.addr %s163, 8
          %s165 = scalar_lea.vmem [#allocation5], %s164
          %166 = dma.done %s162, 128
        $region40: #{tpu_custom_call.1} parent=35 // pred_fallthru
          _
      $region36: #{tpu_custom_call.1} parent=5 // pred_fallthru
        _
    $region6: #{tpu_custom_call.1} parent=1 // loop_footer
      %s17 = sadd.s32 1, %s13
    $region7: #{tpu_custom_call.1} parent=1 // loop_footer_branch
      %12 = sbr.rel target = $region3
    $region8: #{tpu_custom_call.1} parent=1 // loop_exit
      _
    %167 = vsyncpa [#allocation3], 1
    %s168 = scalar_lea.sflag [#allocation3], 1
    %169 = vsyncpa %s168, 1
    %170 = vsyncpa [#allocation4], 1
    %s171 = scalar_lea.sflag [#allocation4], 1
    %172 = vsyncpa %s171, 1

</llo_original>
